<compile_context>
chip_gen: v5e
topology: v5e:2x2
jax: 0.10.0
libtpu: 0.0.40
codegen_flags: <defaults>
</compile_context>

<pallas_src>
import functools

import numpy as np
import jax
import jax.numpy as jnp
from jax import lax
from jax.experimental import pallas as pl
from jax.experimental.pallas import tpu as pltpu

BN_EPS = 1e-5
LEAKY_SLOPE = 0.1


def _round_up(v, m):
    return ((v + m - 1) // m) * m


def _vmem_capacity_bytes():
    """Physical VMEM of the current chip (per TensorCore); conservative fallback."""
    try:
        info = pltpu.get_tpu_info()
        cap = int(getattr(info, "vmem_capacity_bytes", 0))
        if cap > 0:
            return cap
    except Exception:
        pass
    return 64 << 20  # v7x per-TC VMEM; safe lower bound for all generations


def _x_block_spec(block_shape, index_map, depth):
    """x-tile BlockSpec with optional >2-deep pipelining (caller gates depth on VMEM headroom)."""
    if depth > 2:
        try:
            return pl.BlockSpec(block_shape, index_map, pipeline_mode=pl.Buffered(depth))
        except TypeError:  # fallback: default double-buffering
            pass
    return pl.BlockSpec(block_shape, index_map)


def _leaky(z):
    # LeakyReLU(0.1): slope < 1, so a single vmax does it.
    return jnp.maximum(z, LEAKY_SLOPE * z)


# ----------------------------------------------------------------------------------------------
# Fused single-slab kernel (small / medium M*C): matmul accumulate + BN + LeakyReLU in one call.
# ----------------------------------------------------------------------------------------------
def _fused_kernel(x_ref, w_ref, g_ref, beta_ref, o_ref, acc_ref, *, m_true):
    k = pl.program_id(0)
    part = jnp.dot(x_ref[...], w_ref[...], preferred_element_type=jnp.float32)

    @pl.when(k == 0)
    def _():
        acc_ref[...] = part          # no bias: it is cancelled exactly by the BN mean subtraction

    @pl.when(k > 0)
    def _():
        acc_ref[...] += part

    @pl.when(k == pl.num_programs(0) - 1)
    def _():
        y = acc_ref[...]                                              # (M, C) linear output, f32
        inv_m = jnp.float32(1.0 / m_true)
        mean = jnp.sum(y, axis=0, keepdims=True) * inv_m              # (1, C)
        var = jnp.maximum(jnp.sum(y * y, axis=0, keepdims=True) * inv_m - mean * mean, 0.0)
        scale = g_ref[...] * lax.rsqrt(var + BN_EPS)                  # (1, C)
        shift = beta_ref[...] - mean * scale                          # (1, C)
        o_ref[...] = _leaky(y * scale + shift).astype(o_ref.dtype)


def _mlp_1d_fused(x2, w, g2, be2, M, C, Kp, nk, tk, out_dtype, vmem_budget):
    xb = x2.dtype.itemsize
    wb = w.dtype.itemsize
    ob = jnp.dtype(out_dtype).itemsize

    x_bufs = 3 if (nk >= 3 and 3 * M * tk * xb <= (12 << 20)) else 2

    vmem_needed = (M * C * 4 + 2 * M * C * ob + x_bufs * M * tk * xb
                   + 2 * tk * C * wb + 8 * C * 4)
    vmem_limit = int(min(max(vmem_needed + (4 << 20), 16 << 20), vmem_budget))

    kernel = functools.partial(_fused_kernel, m_true=M)
    return pl.pallas_call(
        kernel,
        out_shape=jax.ShapeDtypeStruct((M, C), out_dtype),
        grid_spec=pltpu.PrefetchScalarGridSpec(
            num_scalar_prefetch=0,
            grid=(nk,),
            in_specs=[
                _x_block_spec((M, tk), lambda k: (0, k), x_bufs),   # x tile (streamed over K)
                pl.BlockSpec((tk, C), lambda k: (k, 0)),            # weight tile
                pl.BlockSpec((1, C), lambda k: (0, 0)),             # gamma (resident)
                pl.BlockSpec((1, C), lambda k: (0, 0)),             # beta (resident)
            ],
            out_specs=pl.BlockSpec((M, C), lambda k: (0, 0)),       # resident output
            scratch_shapes=[pltpu.VMEM((M, C), jnp.float32)],       # f32 accumulator
        ),
        compiler_params=pltpu.CompilerParams(
            dimension_semantics=("arbitrary",),
            vmem_limit_bytes=vmem_limit),
        cost_estimate=pl.CostEstimate(
            flops=2 * M * Kp * C,
            transcendentals=0,
            bytes_accessed=M * Kp * xb + Kp * C * wb + M * C * ob),
    )(x2, w, g2, be2)


# ----------------------------------------------------------------------------------------------
# M-tiled two-pass path (large M*C / v7x): pass 1 matmul + partial stats, pass 2 normalize+act.
# ----------------------------------------------------------------------------------------------
def _matmul_stats_kernel(x_ref, w_ref, y_ref, sum_ref, ssq_ref):
    k = pl.program_id(1)
    part = jnp.dot(x_ref[...], w_ref[...], preferred_element_type=jnp.float32)

    @pl.when(k == 0)
    def _():
        y_ref[...] = part            # f32 output block resident across the K axis

    @pl.when(k > 0)
    def _():
        y_ref[...] += part

    @pl.when(k == pl.num_programs(1) - 1)
    def _():
        y = y_ref[...]
        sum_ref[...] = jnp.sum(y, axis=0, keepdims=True)[None]       # (1, 1, C)
        ssq_ref[...] = jnp.sum(y * y, axis=0, keepdims=True)[None]   # (1, 1, C)


def _norm_act_kernel(y_ref, scale_ref, shift_ref, o_ref):
    z = y_ref[...] * scale_ref[...] + shift_ref[...]
    o_ref[...] = _leaky(z).astype(o_ref.dtype)


def _mlp_1d_tiled(x2, w, g2, be2, M, C, Kp, nk, tk, out_dtype, vmem_budget):
    xb = x2.dtype.itemsize
    wb = w.dtype.itemsize
    ob = jnp.dtype(out_dtype).itemsize

    # M tile: balanced across tiles to minimize padding, multiple of 32 (sublane packing for
    # f32/bf16), >=256 rows when M allows it (fills the 256-row MXU on v6e/v7x).
    tm_max = 512
    nm = pl.cdiv(M, tm_max)
    TM = _round_up(pl.cdiv(M, nm), 32)
    Mp = nm * TM
    if Mp != M:
        # Zero-padded rows produce y == 0 (no bias inside the kernel), so they contribute
        # nothing to sum / sum-of-squares; stats below divide by the true M.
        x2 = jnp.pad(x2, ((0, Mp - M), (0, 0)))

    x_bufs = 3 if (nk >= 3 and 3 * TM * tk * xb <= (8 << 20)) else 2

    vmem1 = (2 * TM * C * 4 + x_bufs * TM * tk * xb + 2 * tk * C * wb + 16 * C * 4)
    vmem1 = int(min(max(vmem1 + (4 << 20), 16 << 20), vmem_budget))

    # ---- Pass 1: K-streamed matmul + per-M-tile partial sum / sum-of-squares.
    y, sums, ssqs = pl.pallas_call(
        _matmul_stats_kernel,
        out_shape=(jax.ShapeDtypeStruct((Mp, C), jnp.float32),
                   jax.ShapeDtypeStruct((nm, 1, C), jnp.float32),
                   jax.ShapeDtypeStruct((nm, 1, C), jnp.float32)),
        grid_spec=pltpu.PrefetchScalarGridSpec(
            num_scalar_prefetch=0,
            grid=(nm, nk),
            in_specs=[
                _x_block_spec((TM, tk), lambda m, k: (m, k), x_bufs),   # x tile
                pl.BlockSpec((tk, C), lambda m, k: (k, 0)),             # weight tile
            ],
            out_specs=(
                pl.BlockSpec((TM, C), lambda m, k: (m, 0)),             # linear output tile
                pl.BlockSpec((1, 1, C), lambda m, k: (m, 0, 0)),        # partial sum
                pl.BlockSpec((1, 1, C), lambda m, k: (m, 0, 0)),        # partial sum of squares
            ),
        ),
        compiler_params=pltpu.CompilerParams(
            dimension_semantics=("parallel", "arbitrary"),   # M axis splits across TCs (v7x)
            vmem_limit_bytes=vmem1),
        cost_estimate=pl.CostEstimate(
            flops=2 * Mp * Kp * C,
            transcendentals=0,
            bytes_accessed=Mp * Kp * xb + nm * Kp * C * wb + Mp * C * 4),
    )(x2, w)

    # ---- Combine partial stats and fold BN into one per-channel scale/shift (tiny, XLA).
    inv_m = jnp.float32(1.0 / M)
    mean = jnp.sum(sums, axis=0) * inv_m                                      # (1, C)
    var = jnp.maximum(jnp.sum(ssqs, axis=0) * inv_m - mean * mean, 0.0)       # biased var
    scale = g2 * lax.rsqrt(var + BN_EPS)
    shift = be2 - mean * scale

    vmem2 = int(min(max(2 * TM * C * (4 + ob) + 16 * C * 4 + (4 << 20), 16 << 20), vmem_budget))

    # ---- Pass 2: per-tile normalize + LeakyReLU, pipelined over M (overlaps its own DMA).
    out2 = pl.pallas_call(
        _norm_act_kernel,
        out_shape=jax.ShapeDtypeStruct((Mp, C), out_dtype),
        grid_spec=pltpu.PrefetchScalarGridSpec(
            num_scalar_prefetch=0,
            grid=(nm,),
            in_specs=[
                pl.BlockSpec((TM, C), lambda m: (m, 0)),
                pl.BlockSpec((1, C), lambda m: (0, 0)),
                pl.BlockSpec((1, C), lambda m: (0, 0)),
            ],
            out_specs=pl.BlockSpec((TM, C), lambda m: (m, 0)),
        ),
        compiler_params=pltpu.CompilerParams(
            dimension_semantics=("parallel",),
            vmem_limit_bytes=vmem2),
        cost_estimate=pl.CostEstimate(
            flops=3 * Mp * C,
            transcendentals=0,
            bytes_accessed=Mp * C * 4 + Mp * C * ob),
    )(y, scale, shift)

    return out2


# ----------------------------------------------------------------------------------------------
# Public wrapper.
# ----------------------------------------------------------------------------------------------
@functools.partial(jax.jit, static_argnames=("use_tiled",))
def mlp_1d(x, w, b, gamma, beta, *, use_tiled=None):
    """MLP_1D forward: Linear -> BatchNorm1d (training batch stats) -> LeakyReLU(0.1).

    x: (B, N, in_ch); w: (in_ch, out_ch); b/gamma/beta: (out_ch,).
    The Linear bias `b` is accepted for API parity but never loaded by the kernels: under
    training-mode BatchNorm it is cancelled exactly by the mean subtraction.
    """
    del b
    B, N, K = x.shape
    C = w.shape[1]
    M = B * N
    out_dtype = x.dtype

    x2 = x.reshape(M, K)
    xb = x2.dtype.itemsize
    wb = w.dtype.itemsize
    ob = jnp.dtype(out_dtype).itemsize

    vmem_cap = _vmem_capacity_bytes()
    vmem_budget = int(vmem_cap * 0.85)                 # ~15% headroom for compiler scratch
    max_tk = 1024 if vmem_cap >= (100 << 20) else 512  # larger K tiles on 128 MiB parts

    # K (reduction) tiling: single full-extent step when K is small (no padding, any K);
    # otherwise balanced 128-multiples to minimize padding.
    if K <= max_tk:
        nk, tk, Kp = 1, K, K
    else:
        nk = pl.cdiv(K, max_tk)
        tk = _round_up(pl.cdiv(K, nk), 128)
        Kp = nk * tk

    g2 = gamma.reshape(1, C).astype(jnp.float32)
    be2 = beta.reshape(1, C).astype(jnp.float32)

    # Fused single-slab path only when its whole VMEM footprint is comfortably small for the
    # current chip; otherwise the M-tiled two-pass path (generation-independent per-step VMEM).
    x_bufs_est = 3 if nk >= 3 else 2
    fused_vmem = (M * C * 4 + 2 * M * C * ob + x_bufs_est * M * tk * xb
                  + 2 * tk * C * wb + 8 * C * 4)
    if use_tiled is None:
        use_tiled = fused_vmem > min(vmem_budget // 2, 48 << 20)

    if Kp != K:
        # Zero-padded K columns contribute exactly 0 to the matmul (only hit when K streams
        # and is not tile-aligned).
        x2 = jnp.pad(x2, ((0, 0), (0, Kp - K)))
        w = jnp.pad(w, ((0, Kp - K), (0, 0)))

    if not use_tiled:
        out2 = _mlp_1d_fused(x2, w, g2, be2, M, C, Kp, nk, tk, out_dtype, vmem_budget)
        return out2.reshape(B, N, C)

    out2 = _mlp_1d_tiled(x2, w, g2, be2, M, C, Kp, nk, tk, out_dtype, vmem_budget)
    return out2[:M].reshape(B, N, C)


def mlp_1d_reference(x, w, b, gamma, beta):
    """Pure-JAX reference matching PyTorch MLP_1D forward in training mode."""
    y = jnp.einsum("bnk,kc->bnc", x, w) + b           # Linear (with bias)
    mean = jnp.mean(y, axis=(0, 1), keepdims=True)    # BatchNorm1d batch stats per channel
    var = jnp.mean((y - mean) ** 2, axis=(0, 1), keepdims=True)
    y_hat = (y - mean) / jnp.sqrt(var + BN_EPS)
    z = y_hat * gamma + beta
    return jnp.where(z >= 0, z, LEAKY_SLOPE * z)      # LeakyReLU(0.1)


# TODO(synk): BatchNorm1d's running_mean/running_var buffer updates (a training-time side effect
# of the PyTorch module) are not reproduced; only the returned tensor is computed.

if __name__ == "__main__":
    def make_inputs(key, B, N, in_ch, out_ch, dtype):
        kx, kw, kb, kg, kbe = jax.random.split(key, 5)
        x = jax.random.normal(kx, (B, N, in_ch), jnp.float32)
        bound = 1.0 / np.sqrt(in_ch)
        w = jax.random.uniform(kw, (in_ch, out_ch), jnp.float32, -bound, bound)
        b = jax.random.uniform(kb, (out_ch,), jnp.float32, -bound, bound)
        gamma = jnp.ones((out_ch,), jnp.float32) + 0.05 * jax.random.normal(kg, (out_ch,), jnp.float32)
        beta = 0.05 * jax.random.normal(kbe, (out_ch,), jnp.float32)
        return x.astype(dtype), w.astype(dtype), b, gamma, beta

    key = jax.random.PRNGKey(0)
    k1, k2, k3, k4 = jax.random.split(key, 4)

    # 1) Small case -> fused single-slab path.
    x, w, b, g, be = make_inputs(k1, 2, 16, 256, 128, jnp.float32)
    out = jax.block_until_ready(mlp_1d(x, w, b, g, be))
    ref = mlp_1d_reference(x, w, b, g, be)
    np.testing.assert_allclose(np.asarray(out), np.asarray(ref), rtol=1e-4, atol=1e-4)

    # 2) M-tiled two-pass path (nm > 1, partial-stat combine), forced.
    x, w, b, g, be = make_inputs(k2, 2, 384, 192, 256, jnp.float32)
    out = jax.block_until_ready(mlp_1d(x, w, b, g, be, use_tiled=True))
    ref = mlp_1d_reference(x, w, b, g, be)
    np.testing.assert_allclose(np.asarray(out), np.asarray(ref), rtol=1e-4, atol=1e-4)

    # 3) Streaming-K case (nk > 1, exercises K accumulation + deeper x buffering) through both paths.
    x, w, b, g, be = make_inputs(k3, 1, 128, 3072, 128, jnp.float32)
    ref = mlp_1d_reference(x, w, b, g, be)
    out = jax.block_until_ready(mlp_1d(x, w, b, g, be))
    np.testing.assert_allclose(np.asarray(out), np.asarray(ref), rtol=2e-4, atol=2e-4)
    out = jax.block_until_ready(mlp_1d(x, w, b, g, be, use_tiled=True))
    np.testing.assert_allclose(np.asarray(out), np.asarray(ref), rtol=2e-4, atol=2e-4)

    # 4) bf16 fast path (bf16 x/w into the MXU, f32 accumulate, bf16 output).
    x, w, b, g, be = make_inputs(k4, 2, 64, 256, 128, jnp.bfloat16)
    out = jax.block_until_ready(mlp_1d(x, w, b, g, be))
    assert out.dtype == jnp.bfloat16
    ref = mlp_1d_reference(x.astype(jnp.float32), w.astype(jnp.float32), b, g, be)
    np.testing.assert_allclose(np.asarray(out, dtype=np.float32), np.asarray(ref),
                               rtol=5e-2, atol=5e-2)

    print("KERNEL_OK")
</pallas_src>

<mosaic_0001>
module attributes {stable_mosaic.version = 11 : i64} {
  func.func @_fused_kernel(%arg0: i32, %arg1: memref<32x256xf32, #tpu.memory_space<vmem>>, %arg2: memref<256x128xf32, #tpu.memory_space<vmem>>, %arg3: memref<1x128xf32, #tpu.memory_space<vmem>>, %arg4: memref<1x128xf32, #tpu.memory_space<vmem>>, %arg5: memref<32x128xf32, #tpu.memory_space<vmem>>, %arg6: memref<32x128xf32, #tpu.memory_space<vmem>>) attributes {dimension_semantics = [#tpu.dimension_semantics<arbitrary>], iteration_bounds = array<i64: 1>, scalar_prefetch = 0 : i64, scratch_operands = 1 : i64, tpu.core_type = #tpu.core_type<tc>, window_params = [{transform_indices = @transform_0, window_bounds = array<i64: 32, 256>}, {transform_indices = @transform_1, window_bounds = array<i64: 256, 128>}, {pipeline_mode = #tpu.pipeline_mode<synchronous>, transform_indices = @transform_2, window_bounds = array<i64: 1, 128>}, {pipeline_mode = #tpu.pipeline_mode<synchronous>, transform_indices = @transform_3, window_bounds = array<i64: 1, 128>}, {pipeline_mode = #tpu.pipeline_mode<synchronous>, transform_indices = @transform_4, window_bounds = array<i64: 32, 128>}]} {
    %c0 = arith.constant 0 : index
    %c0_0 = arith.constant 0 : index
    %0 = vector.load %arg1[%c0, %c0_0] : memref<32x256xf32, #tpu.memory_space<vmem>>, vector<32x256xf32>
    %c0_1 = arith.constant 0 : index
    %c0_2 = arith.constant 0 : index
    %1 = vector.load %arg2[%c0_1, %c0_2] : memref<256x128xf32, #tpu.memory_space<vmem>>, vector<256x128xf32>
    %cst = arith.constant dense<0.000000e+00> : vector<32x128xf32>
    %2 = tpu.matmul %0, %1, %cst {dimension_numbers = #tpu.dot_dimension_numbers<[1], [0], [0], [1], [0, 0, 1, 1], [], []>} : vector<32x256xf32>, vector<256x128xf32>, vector<32x128xf32> -> vector<32x128xf32>
    %c0_i32 = arith.constant 0 : i32
    %3 = arith.cmpi eq, %arg0, %c0_i32 : i32
    %4 = arith.extui %3 : i1 to i32
    %c0_i32_3 = arith.constant 0 : i32
    %5 = arith.cmpi ne, %4, %c0_i32_3 : i32
    scf.if %5 {
      %c0_8 = arith.constant 0 : index
      %c0_9 = arith.constant 0 : index
      %12 = vector.load %arg6[%c0_8, %c0_9] : memref<32x128xf32, #tpu.memory_space<vmem>>, vector<32x128xf32>
      tpu.vector_store %arg6[%c0_8, %c0_9], %2 {strides = array<i32>} : memref<32x128xf32, #tpu.memory_space<vmem>>, vector<32x128xf32>,
    } else {
    }
    %c0_i32_4 = arith.constant 0 : i32
    %6 = arith.cmpi sgt, %arg0, %c0_i32_4 : i32
    %7 = arith.extui %6 : i1 to i32
    %c0_i32_5 = arith.constant 0 : i32
    %8 = arith.cmpi ne, %7, %c0_i32_5 : i32
    scf.if %8 {
      %c0_8 = arith.constant 0 : index
      %c0_9 = arith.constant 0 : index
      %12 = vector.load %arg6[%c0_8, %c0_9] : memref<32x128xf32, #tpu.memory_space<vmem>>, vector<32x128xf32>
      %13 = arith.addf %12, %2 : vector<32x128xf32>
      %c0_10 = arith.constant 0 : index
      %c0_11 = arith.constant 0 : index
      %14 = vector.load %arg6[%c0_10, %c0_11] : memref<32x128xf32, #tpu.memory_space<vmem>>, vector<32x128xf32>
      tpu.vector_store %arg6[%c0_10, %c0_11], %13 {strides = array<i32>} : memref<32x128xf32, #tpu.memory_space<vmem>>, vector<32x128xf32>,
    } else {
    }
    %c0_i32_6 = arith.constant 0 : i32
    %9 = arith.cmpi eq, %arg0, %c0_i32_6 : i32
    %10 = arith.extui %9 : i1 to i32
    %c0_i32_7 = arith.constant 0 : i32
    %11 = arith.cmpi ne, %10, %c0_i32_7 : i32
    scf.if %11 {
      %c0_8 = arith.constant 0 : index
      %c0_9 = arith.constant 0 : index
      %12 = vector.load %arg6[%c0_8, %c0_9] : memref<32x128xf32, #tpu.memory_space<vmem>>, vector<32x128xf32>
      %cst_10 = arith.constant dense<0.000000e+00> : vector<128xf32>
      %13 = vector.multi_reduction <add>, %12, %cst_10 [0] : vector<32x128xf32> to vector<128xf32>
      %14 = vector.shape_cast %13 : vector<128xf32> to vector<1x128xf32>
      %cst_11 = arith.constant 3.125000e-02 : f32
      %15 = vector.broadcast %cst_11 : f32 to vector<1x128xf32>
      %16 = arith.mulf %14, %15 : vector<1x128xf32>
      %17 = arith.mulf %12, %12 : vector<32x128xf32>
      %cst_12 = arith.constant dense<0.000000e+00> : vector<128xf32>
      %18 = vector.multi_reduction <add>, %17, %cst_12 [0] : vector<32x128xf32> to vector<128xf32>
      %19 = vector.shape_cast %18 : vector<128xf32> to vector<1x128xf32>
      %cst_13 = arith.constant 3.125000e-02 : f32
      %20 = vector.broadcast %cst_13 : f32 to vector<1x128xf32>
      %21 = arith.mulf %19, %20 : vector<1x128xf32>
      %22 = arith.mulf %16, %16 : vector<1x128xf32>
      %23 = arith.subf %21, %22 : vector<1x128xf32>
      %cst_14 = arith.constant 0.000000e+00 : f32
      %24 = vector.broadcast %cst_14 : f32 to vector<1x128xf32>
      %25 = arith.maximumf %23, %24 : vector<1x128xf32>
      %c0_15 = arith.constant 0 : index
      %c0_16 = arith.constant 0 : index
      %26 = vector.load %arg3[%c0_15, %c0_16] : memref<1x128xf32, #tpu.memory_space<vmem>>, vector<1x128xf32>
      %cst_17 = arith.constant 9.99999974E-6 : f32
      %27 = vector.broadcast %cst_17 : f32 to vector<1x128xf32>
      %28 = arith.addf %25, %27 : vector<1x128xf32>
      %29 = math.rsqrt %28 : vector<1x128xf32>
      %30 = arith.mulf %26, %29 : vector<1x128xf32>
      %c0_18 = arith.constant 0 : index
      %c0_19 = arith.constant 0 : index
      %31 = vector.load %arg4[%c0_18, %c0_19] : memref<1x128xf32, #tpu.memory_space<vmem>>, vector<1x128xf32>
      %32 = arith.mulf %16, %30 : vector<1x128xf32>
      %33 = arith.subf %31, %32 : vector<1x128xf32>
      %34 = vector.broadcast %30 : vector<1x128xf32> to vector<32x128xf32>
      %35 = arith.mulf %12, %34 : vector<32x128xf32>
      %36 = vector.broadcast %33 : vector<1x128xf32> to vector<32x128xf32>
      %37 = arith.addf %35, %36 : vector<32x128xf32>
      %cst_20 = arith.constant 1.000000e-01 : f32
      %38 = vector.broadcast %cst_20 : f32 to vector<32x128xf32>
      %39 = arith.mulf %38, %37 : vector<32x128xf32>
      %40 = arith.maximumf %37, %39 : vector<32x128xf32>
      %c0_21 = arith.constant 0 : index
      %c0_22 = arith.constant 0 : index
      %41 = vector.load %arg5[%c0_21, %c0_22] : memref<32x128xf32, #tpu.memory_space<vmem>>, vector<32x128xf32>
      tpu.vector_store %arg5[%c0_21, %c0_22], %40 {strides = array<i32>} : memref<32x128xf32, #tpu.memory_space<vmem>>, vector<32x128xf32>,
    } else {
    }
    return
  }
  func.func @transform_0(%arg0: i32) -> (i32, i32) {
    %c0_i32 = arith.constant 0 : i32
    %c0_i32_0 = arith.constant 0 : i32
    return %c0_i32, %arg0 : i32, i32
  }
  func.func @transform_1(%arg0: i32) -> (i32, i32) {
    %c0_i32 = arith.constant 0 : i32
    %c0_i32_0 = arith.constant 0 : i32
    return %arg0, %c0_i32 : i32, i32
  }
  func.func @transform_2(%arg0: i32) -> (i32, i32) {
    %c0_i32 = arith.constant 0 : i32
    %c0_i32_0 = arith.constant 0 : i32
    %c0_i32_1 = arith.constant 0 : i32
    return %c0_i32, %c0_i32_0 : i32, i32
  }
  func.func @transform_3(%arg0: i32) -> (i32, i32) {
    %c0_i32 = arith.constant 0 : i32
    %c0_i32_0 = arith.constant 0 : i32
    %c0_i32_1 = arith.constant 0 : i32
    return %c0_i32, %c0_i32_0 : i32, i32
  }
  func.func @transform_4(%arg0: i32) -> (i32, i32) {
    %c0_i32 = arith.constant 0 : i32
    %c0_i32_0 = arith.constant 0 : i32
    %c0_i32_1 = arith.constant 0 : i32
    return %c0_i32, %c0_i32_0 : i32, i32
  }
}

</mosaic_0001>

<llo_original>
// kernel: mlp_1d.1
$region0: #{mlp_1d.1}
  #allocation0 [shape = 'u32[]', space=smem, size = 0x4, offset = 0x4, fixed_abs, tag = 'smem constant byte address 0x4 - core index']
  #allocation1 [shape = 'u32[72,128]{1,0:T(1,128)}', space=vmem, size = 0x9000, scoped, tag = 'internal scratch']
  #allocation2 [shape = 'f32[32,128]{1,0:T(8,128)}', space=vmem, size = 0x4000, scoped, tag = 'scratch operand']
  %s0 = inlined_call_operand.hbm [shape: f32[32,256], index: 0, kind: input, shape index: {}]
  %s1 = inlined_call_operand.hbm [shape: f32[256,128], index: 1, kind: input, shape index: {}]
  %s2 = inlined_call_operand.vmem [shape: f32[1,128], index: 2, kind: input, shape index: {}]
  %s3 = inlined_call_operand.vmem [shape: f32[1,128], index: 3, kind: input, shape index: {}]
  %s4 = inlined_call_operand.hbm [shape: f32[32,128], index: 4, kind: output, shape index: {}]
  %s5 = sld [smem:[#allocation0]]
  $region46: #{mlp_1d.1} parent=0
    _
  %s7 = ssub.s32 1, %s5
  %s8 = scalar_select 0, %s7, %s5
  $region1: #{mlp_1d.1} parent=0
    #allocation3 [shape = 'u8[32768]{0}', space=vmem, size = 0x8000, scoped, tag = 'input window, operand 0, single buffered']
    #allocation4 [shape = 's32[1]{0}', space=sflag, size = 0x4, scoped, tag = 'scoped memory for mlp_1d.1']
    #allocation5 [shape = 's32[1]{0}', space=sflag, size = 0x4, scoped, tag = 'scoped memory for mlp_1d.1']
    #allocation6 [shape = 'u8[131072]{0}', space=vmem, size = 0x20000, scoped, tag = 'input window, operand 1, single buffered']
    #allocation7 [shape = 's32[1]{0}', space=sflag, size = 0x4, scoped, tag = 'scoped memory for mlp_1d.1']
    #allocation8 [shape = 'u8[16384]{0}', space=vmem, size = 0x4000, scoped, tag = 'output window, operand 0, single buffered']
    %9 = vsyncpa [#allocation4], 0
    %10 = vsyncpa [#allocation7], 0
    %11 = vsyncpa [#allocation5], 0
    // Predicated region
    $region2: #{mlp_1d.1} parent=1 // pred_check
      _
    $region3: #{mlp_1d.1} parent=1 // pred_check_branch
      %13 = sbr.rel (0) target = $region5
    $region4: #{mlp_1d.1} parent=1 // pred_region
      %15 = vsyncadd [#allocation4], 0
      %s16 = sshll.u32 %s0, 4
      %s17 = int_to_ptr.hbm [resolvable:$true] %s16
      %s18 = sshll.u32 [#allocation3], 4
      %s19 = int_to_ptr.vmem [resolvable:$true] %s18
      %24 = dma.hbm_to_vmem [thread:$0]  %s17, 1024, %s19, [#allocation4], 256, 256, 16
    $region5: #{mlp_1d.1} parent=1 // pred_fallthru
      _
    // Predicated region
    $region6: #{mlp_1d.1} parent=1 // pred_check
      _
    $region7: #{mlp_1d.1} parent=1 // pred_check_branch
      %26 = sbr.rel (0) target = $region9
    $region8: #{mlp_1d.1} parent=1 // pred_region
      %28 = vsyncadd [#allocation7], 0
      %s29 = sshll.u32 %s1, 4
      %s30 = int_to_ptr.hbm [resolvable:$true] %s29
      %s31 = sshll.u32 [#allocation6], 4
      %s32 = int_to_ptr.vmem [resolvable:$true] %s31
      %37 = dma.hbm_to_vmem [thread:$0]  %s30, 4096, %s32, [#allocation7], 128, 128, 8
    $region9: #{mlp_1d.1} parent=1 // pred_fallthru
      _
    // Predicated region
    $region10: #{mlp_1d.1} parent=1 // pred_check
      _
    $region11: #{mlp_1d.1} parent=1 // pred_check_branch
      %39 = sbr.rel (0) target = $region13
    $region12: #{mlp_1d.1} parent=1 // pred_region
      _
    $region13: #{mlp_1d.1} parent=1 // pred_fallthru
      _
    // Predicated region
    $region14: #{mlp_1d.1} parent=1 // pred_check
      _
    $region15: #{mlp_1d.1} parent=1 // pred_check_branch
      %41 = sbr.rel (0) target = $region17
    $region16: #{mlp_1d.1} parent=1 // pred_region
      _
    $region17: #{mlp_1d.1} parent=1 // pred_fallthru
      _
    // Predicated region
    $region18: #{mlp_1d.1} parent=1 // pred_check
      _
    $region19: #{mlp_1d.1} parent=1 // pred_check_branch
      %43 = sbr.rel (0) target = $region21
    $region20: #{mlp_1d.1} parent=1 // pred_region
      %45 = dma.done [#allocation4], 1024
    $region21: #{mlp_1d.1} parent=1 // pred_fallthru
      _
    // Predicated region
    $region22: #{mlp_1d.1} parent=1 // pred_check
      _
    $region23: #{mlp_1d.1} parent=1 // pred_check_branch
      %47 = sbr.rel (0) target = $region25
    $region24: #{mlp_1d.1} parent=1 // pred_region
      %49 = dma.done [#allocation7], 4096
    $region25: #{mlp_1d.1} parent=1 // pred_fallthru
      _
    %v50 = vld [vmem:[#allocation3] sm:$0xff]
    %v51 = vld [vmem:[#allocation3 + $0x8] sm:$0xff]
    %v52 = vld [vmem:[#allocation3 + $0x10] sm:$0xff]
    %v53 = vld [vmem:[#allocation3 + $0x18] sm:$0xff]
    %v54 = vld [vmem:[#allocation3 + $0x20] sm:$0xff]
    %v55 = vld [vmem:[#allocation3 + $0x28] sm:$0xff]
    %v56 = vld [vmem:[#allocation3 + $0x30] sm:$0xff]
    %v57 = vld [vmem:[#allocation3 + $0x38] sm:$0xff]
    %v58 = vld [vmem:[#allocation6] sm:$0xff]
    %v59 = vld [vmem:[#allocation6 + $0x8] sm:$0xff]
    %v60 = vld [vmem:[#allocation6 + $0x10] sm:$0xff]
    %v61 = vld [vmem:[#allocation6 + $0x18] sm:$0xff]
    %v62 = vld [vmem:[#allocation6 + $0x20] sm:$0xff]
    %v63 = vld [vmem:[#allocation6 + $0x28] sm:$0xff]
    %v64 = vld [vmem:[#allocation6 + $0x30] sm:$0xff]
    %v65 = vld [vmem:[#allocation6 + $0x38] sm:$0xff]
    %v66 = vld [vmem:[#allocation6 + $0x40] sm:$0xff]
    %v67 = vld [vmem:[#allocation6 + $0x48] sm:$0xff]
    %v68 = vld [vmem:[#allocation6 + $0x50] sm:$0xff]
    %v69 = vld [vmem:[#allocation6 + $0x58] sm:$0xff]
    %v70 = vld [vmem:[#allocation6 + $0x60] sm:$0xff]
    %v71 = vld [vmem:[#allocation6 + $0x68] sm:$0xff]
    %v72 = vld [vmem:[#allocation6 + $0x70] sm:$0xff]
    %v73 = vld [vmem:[#allocation6 + $0x78] sm:$0xff]
    %v74 = vld [vmem:[#allocation6 + $0x80] sm:$0xff]
    %v75 = vld [vmem:[#allocation6 + $0x88] sm:$0xff]
    %v76 = vld [vmem:[#allocation6 + $0x90] sm:$0xff]
    %v77 = vld [vmem:[#allocation6 + $0x98] sm:$0xff]
    %v78 = vld [vmem:[#allocation6 + $0xa0] sm:$0xff]
    %v79 = vld [vmem:[#allocation6 + $0xa8] sm:$0xff]
    %v80 = vld [vmem:[#allocation6 + $0xb0] sm:$0xff]
    %v81 = vld [vmem:[#allocation6 + $0xb8] sm:$0xff]
    %v82 = vld [vmem:[#allocation6 + $0xc0] sm:$0xff]
    %v83 = vld [vmem:[#allocation6 + $0xc8] sm:$0xff]
    %v84 = vld [vmem:[#allocation6 + $0xd0] sm:$0xff]
    %v85 = vld [vmem:[#allocation6 + $0xd8] sm:$0xff]
    %v86 = vld [vmem:[#allocation6 + $0xe0] sm:$0xff]
    %v87 = vld [vmem:[#allocation6 + $0xe8] sm:$0xff]
    %v88 = vld [vmem:[#allocation6 + $0xf0] sm:$0xff]
    %v89 = vld [vmem:[#allocation6 + $0xf8] sm:$0xff]
    %90 = vmatpush.msra.mxu0 %v73
    %91 = vmatpush.msra.mxu0 %v72
    %92 = vmatpush.msra.mxu0 %v71
    %93 = vmatpush.msra.mxu0 %v70
    %94 = vmatpush.msra.mxu0 %v69
    %95 = vmatpush.msra.mxu0 %v68
    %96 = vmatpush.msra.mxu0 %v67
    %97 = vmatpush.msra.mxu0 %v66
    %98 = vmatpush.msra.mxu0 %v65
    %99 = vmatpush.msra.mxu0 %v64
    %100 = vmatpush.msra.mxu0 %v63
    %101 = vmatpush.msra.mxu0 %v62
    %102 = vmatpush.msra.mxu0 %v61
    %103 = vmatpush.msra.mxu0 %v60
    %104 = vmatpush.msra.mxu0 %v59
    %105 = vmatpush.msra.mxu0 %v58
    %106 = vmatmul.f32.gmra.mxu0 %v50
    %v107 = vpop.f32.mrf.mxu0
    %v108 = vadd.f32 0.0, %v107
    %109 = vmatmul.f32.gmra.mxu0 %v52
    %v110 = vpop.f32.mrf.mxu0
    %v111 = vadd.f32 0.0, %v110
    %112 = vmatmul.f32.gmra.mxu0 %v54
    %v113 = vpop.f32.mrf.mxu0
    %v114 = vadd.f32 0.0, %v113
    %115 = vmatmul.f32.gmra.mxu0 %v56
    %v116 = vpop.f32.mrf.mxu0
    %v117 = vadd.f32 0.0, %v116
    %118 = vdwg.mxu0
    %119 = vmatpush.msra.mxu0 %v89
    %120 = vmatpush.msra.mxu0 %v88
    %121 = vmatpush.msra.mxu0 %v87
    %122 = vmatpush.msra.mxu0 %v86
    %123 = vmatpush.msra.mxu0 %v85
    %124 = vmatpush.msra.mxu0 %v84
    %125 = vmatpush.msra.mxu0 %v83
    %126 = vmatpush.msra.mxu0 %v82
    %127 = vmatpush.msra.mxu0 %v81
    %128 = vmatpush.msra.mxu0 %v80
    %129 = vmatpush.msra.mxu0 %v79
    %130 = vmatpush.msra.mxu0 %v78
    %131 = vmatpush.msra.mxu0 %v77
    %132 = vmatpush.msra.mxu0 %v76
    %133 = vmatpush.msra.mxu0 %v75
    %134 = vmatpush.msra.mxu0 %v74
    %135 = vmatmul.f32.gmra.mxu0 %v51
    %v136 = vpop.f32.mrf.mxu0
    %v137 = vadd.f32 %v108, %v136
    %138 = vmatmul.f32.gmra.mxu0 %v53
    %v139 = vpop.f32.mrf.mxu0
    %v140 = vadd.f32 %v111, %v139
    %141 = vmatmul.f32.gmra.mxu0 %v55
    %v142 = vpop.f32.mrf.mxu0
    %v143 = vadd.f32 %v114, %v142
    %144 = vmatmul.f32.gmra.mxu0 %v57
    %v145 = vpop.f32.mrf.mxu0
    %v146 = vadd.f32 %v117, %v145
    %147 = vdwg.mxu0
    %p148 = scmp.eq.s32.totalorder 0, 0
    // Predicated region
    $region26: #{mlp_1d.1} parent=1 // pred_check
      %p149 = pneg %p148
    $region27: #{mlp_1d.1} parent=1 // pred_check_branch
      %151 = sbr.rel (%p149) target = $region29
    $region28: #{mlp_1d.1} parent=1 // pred_region
      %152 = vst [vmem:[#allocation2] sm:$0xff] %v137
      %153 = vst [vmem:[#allocation2 + $0x8] sm:$0xff] %v140
      %154 = vst [vmem:[#allocation2 + $0x10] sm:$0xff] %v143
      %155 = vst [vmem:[#allocation2 + $0x18] sm:$0xff] %v146
    $region29: #{mlp_1d.1} parent=1 // pred_fallthru
      _
    %p156 = scmp.gt.s32.totalorder 0, 0
    // Predicated region
    $region30: #{mlp_1d.1} parent=1 // pred_check
      %p157 = pneg %p156
    $region31: #{mlp_1d.1} parent=1 // pred_check_branch
      %159 = sbr.rel (%p157) target = $region33
    $region32: #{mlp_1d.1} parent=1 // pred_region
      %v160 = vld [vmem:[#allocation2] sm:$0xff]
      %v161 = vld [vmem:[#allocation2 + $0x8] sm:$0xff]
      %v162 = vld [vmem:[#allocation2 + $0x10] sm:$0xff]
      %v163 = vld [vmem:[#allocation2 + $0x18] sm:$0xff]
      %v164 = vadd.f32 %v160, %v137
      %v165 = vadd.f32 %v161, %v140
      %v166 = vadd.f32 %v162, %v143
      %v167 = vadd.f32 %v163, %v146
      %168 = vst [vmem:[#allocation2] sm:$0xff] %v164
      %169 = vst [vmem:[#allocation2 + $0x8] sm:$0xff] %v165
      %170 = vst [vmem:[#allocation2 + $0x10] sm:$0xff] %v166
      %171 = vst [vmem:[#allocation2 + $0x18] sm:$0xff] %v167
    $region33: #{mlp_1d.1} parent=1 // pred_fallthru
      _
    // Predicated region
    $region34: #{mlp_1d.1} parent=1 // pred_check
      %p172 = pneg %p148
    $region35: #{mlp_1d.1} parent=1 // pred_check_branch
      %174 = sbr.rel (%p172) target = $region37
    $region36: #{mlp_1d.1} parent=1 // pred_region
      %v175 = vld [vmem:[#allocation2] sm:$0xff]
      %v176 = vld [vmem:[#allocation2 + $0x8] sm:$0xff]
      %v177 = vld [vmem:[#allocation2 + $0x10] sm:$0xff]
      %v178 = vld [vmem:[#allocation2 + $0x18] sm:$0xff]
      %v179 = vadd.f32 %v175, %v176
      %v180 = vadd.f32 %v179, %v177
      %v181 = vadd.f32 %v180, %v178
      %v182 = vrot.slane %v181, 4
      %v183 = vadd.f32 %v181, %v182
      %v184 = vrot.slane %v183, 2
      %v185 = vadd.f32 %v183, %v184
      %v186 = vrot.slane %v185, 1
      %v187 = vadd.f32 %v185, %v186
      %v188 = vmul.f32 %v187, 0.03125
      %v189 = vmul.f32 %v175, %v175
      %v190 = vmul.f32 %v176, %v176
      %v191 = vmul.f32 %v177, %v177
      %v192 = vmul.f32 %v178, %v178
      %v193 = vadd.f32 %v189, %v190
      %v194 = vadd.f32 %v193, %v191
      %v195 = vadd.f32 %v194, %v192
      %v196 = vrot.slane %v195, 4
      %v197 = vadd.f32 %v195, %v196
      %v198 = vrot.slane %v197, 2
      %v199 = vadd.f32 %v197, %v198
      %v200 = vrot.slane %v199, 1
      %v201 = vadd.f32 %v199, %v200
      %v202 = vmul.f32 %v201, 0.03125
      %v203 = vmul.f32 %v188, %v188
      %v204 = vsub.f32 %v202, %v203
      %v205 = vmax.f32 %v204, 0.0
      %v206 = vld [vmem:[%s2] sm:$0x1]
      %v207 = vadd.f32 %v205, 1e-05
      %v208 = vrsqrt.pop %v207
      %v209 = vmul.f32 %v208, %v207
      %v210 = vmul.f32 %v209, %v208
      %v211 = vmul.f32 0.5, %v210
      %v212 = vsub.f32 1.5, %v211
      %v213 = vmul.f32 %v208, %v212
      %vm214 = vweird.f32 %v207
      %vm215 = vweird.f32 %v208
      %vm216 = vmor %vm214, %vm215
      %v217 = vsel %vm216, %v208, %v213
      %v218 = vmul.f32 %v206, %v217
      %v219 = vld [vmem:[%s3] sm:$0x1]
      %v220 = vmul.f32 %v188, %v218
      %v221 = vsub.f32 %v219, %v220
      %v223 = vperm.slane %v218, 0
      %v225 = vmul.f32 %v175, %v223
      %v226 = vmul.f32 %v176, %v223
      %v227 = vmul.f32 %v177, %v223
      %v228 = vmul.f32 %v178, %v223
      %v230 = vperm.slane %v221, 0
      %v232 = vadd.f32 %v225, %v230
      %v233 = vadd.f32 %v226, %v230
      %v234 = vadd.f32 %v227, %v230
      %v235 = vadd.f32 %v228, %v230
      %v236 = vmul.f32 %v232, 0.1
      %v237 = vmul.f32 %v233, 0.1
      %v238 = vmul.f32 %v234, 0.1
      %v239 = vmul.f32 %v235, 0.1
      %v240 = vmax.f32 %v232, %v236
      %v241 = vmax.f32 %v233, %v237
      %v242 = vmax.f32 %v234, %v238
      %v243 = vmax.f32 %v235, %v239
      %244 = vst [vmem:[#allocation8] sm:$0xff] %v240
      %245 = vst [vmem:[#allocation8 + $0x8] sm:$0xff] %v241
      %246 = vst [vmem:[#allocation8 + $0x10] sm:$0xff] %v242
      %247 = vst [vmem:[#allocation8 + $0x18] sm:$0xff] %v243
    $region37: #{mlp_1d.1} parent=1 // pred_fallthru
      _
    // Predicated region
    $region38: #{mlp_1d.1} parent=1 // pred_check
      _
    $region39: #{mlp_1d.1} parent=1 // pred_check_branch
      %249 = sbr.rel (0) target = $region41
    $region40: #{mlp_1d.1} parent=1 // pred_region
      %251 = vsyncadd [#allocation5], 0
      %s252 = sshll.u32 [#allocation8], 4
      %s253 = int_to_ptr.vmem [resolvable:$true] %s252
      %s254 = sshll.u32 %s4, 4
      %s255 = int_to_ptr.hbm [resolvable:$true] %s254
      %260 = dma.vmem_to_hbm [thread:$0]  %s253, 512, %s255, [#allocation5], 128, 128, 8
    $region41: #{mlp_1d.1} parent=1 // pred_fallthru
      _
    // Predicated region
    $region42: #{mlp_1d.1} parent=1 // pred_check
      _
    $region43: #{mlp_1d.1} parent=1 // pred_check_branch
      %262 = sbr.rel (0) target = $region45
    $region44: #{mlp_1d.1} parent=1 // pred_region
      %264 = dma.done [#allocation5], 512
    $region45: #{mlp_1d.1} parent=1 // pred_fallthru
      _
    %265 = vsyncpa [#allocation4], 1
    %266 = vsyncpa [#allocation7], 1
    %267 = vsyncpa [#allocation5], 1

</llo_original>
